<compile_context>
chip_gen: v5e
topology: v5e:2x2
jax: 0.10.0
libtpu: 0.0.40
codegen_flags: <defaults>
</compile_context>

<pallas_src>
import functools

import numpy as np
import jax
import jax.numpy as jnp
from jax import lax
from jax.experimental import pallas as pl
from jax.experimental.pallas import tpu as pltpu


# ----------------------------------------------------------------------------
# Helpers
# ----------------------------------------------------------------------------
def _round_up(x, m):
    return ((x + m - 1) // m) * m


def _vmem_budget_bytes():
    """Generation-aware VMEM budget: ~48 MB on v7x (64 MiB phys), 64 MB on v5e/v6e."""
    cap = 64 << 20  # conservative fallback = v7x per-core VMEM
    try:
        info = pltpu.get_tpu_info()
        for name in ("vmem_capacity_bytes", "vmem_bytes", "vmem_size_bytes"):
            v = getattr(info, name, None)
            if v:
                cap = int(v)
                break
    except Exception:
        pass
    return min(64 << 20, int(cap * 0.75))


def _tf_bilinear(para):
    """Synthetic `input_tf`: upper-triangular pairwise products of channels."""
    c1 = para.shape[1]
    ii, jj = np.triu_indices(c1)
    return para[:, ii] * para[:, jj]  # (Cout, C1*(C1+1)//2)


def _plan_streaming(hw, c1, cout, d, budget, tile_target):
    """Choose (tile, n_total, n_split, hw_pad) for the two-pass streaming path."""
    hw128 = _round_up(hw, 128)
    # Per-column VMEM bytes of pass 2 (the heavier pass): double-buffered
    # x / out / abund blocks plus f32 intermediates (a, exp, acc).
    bpc = 4 * (2 * (c1 + cout + d) + (2 * d + cout))
    tile_max = max(128, (int(budget * 0.9) // bpc) // 128 * 128)
    if tile_target is not None:
        tile_max = max(128, min(tile_max, _round_up(int(tile_target), 128)))
    tile_max = min(tile_max, hw128)
    n_total = pl.cdiv(hw128, tile_max)
    n_split = 2 if n_total >= 2 else 1            # shard pass-1 across 2 TCs (v7x)
    n_total = _round_up(n_total, n_split)
    tile = _round_up(pl.cdiv(hw128, n_total), 128)
    hw_pad = tile * n_total
    return tile, n_total, n_split, hw_pad


# ----------------------------------------------------------------------------
# Single-pass kernel (whole image resident in VMEM): one x read, one launch.
#   abund = softmax(relu(w2@x + b2), axis=-1)
#   out   = clip(w1@x + endm@abund, 0, 1)
# ----------------------------------------------------------------------------
def _s2img_single_kernel(x_ref, w1_ref, w2_ref, b2_ref, endm_ref,
                         out_ref, abund_ref):
    x = x_ref[...]
    a = jnp.dot(w2_ref[...], x, preferred_element_type=jnp.float32)
    a = jnp.maximum(a + b2_ref[...], 0.0)                       # (D, HW)
    m = jnp.max(a, axis=1, keepdims=True)
    e = jnp.exp(a - m)
    l = jnp.sum(e, axis=1, keepdims=True)
    abund = e * (1.0 / l)                                       # exact: rows sum to 1
    abund_ref[...] = abund.astype(abund_ref.dtype)

    acc = jnp.dot(w1_ref[...], x, preferred_element_type=jnp.float32)    # (Cout, HW)
    acc = acc + jnp.dot(endm_ref[...], abund, preferred_element_type=jnp.float32)
    out_ref[...] = jnp.clip(acc, 0.0, 1.0).astype(out_ref.dtype)


# ----------------------------------------------------------------------------
# Pass 1 (streaming): online softmax statistics over the spatial axis.
#   a = relu(w2 @ x_tile + b2)    (D, T)
#   accumulate running row max m and rescaled exp-sum l across HW tiles,
#   independently per TensorCore-half (leading "parallel" grid axis).
# Padded columns (x = 0) are masked out of the exp-sum; including them in the
# running max is harmless (it only shifts the stable-softmax pivot).
# ----------------------------------------------------------------------------
def _abund_stats_kernel(x_ref,    # (C1, T)
                        w2_ref,   # (D, C1)
                        b2_ref,   # (D, 1)
                        m_ref,    # (D, 1) running max   (resident accumulator)
                        l_ref,    # (D, 1) running exp-sum
                        *, tile, hw, n_inner, need_mask):
    i = pl.program_id(1)

    @pl.when(i == 0)
    def _():
        # a >= 0 after ReLU, so 0 is a valid lower bound for the running max.
        m_ref[...] = jnp.zeros_like(m_ref)
        l_ref[...] = jnp.zeros_like(l_ref)

    a = jnp.dot(w2_ref[...], x_ref[...], preferred_element_type=jnp.float32)
    a = jnp.maximum(a + b2_ref[...], 0.0)                       # (D, T)

    m_prev = m_ref[...]
    m_new = jnp.maximum(m_prev, jnp.max(a, axis=1, keepdims=True))
    e = jnp.exp(a - m_new)
    if need_mask:
        col0 = (pl.program_id(0) * n_inner + i) * tile
        idx = col0 + lax.broadcasted_iota(jnp.int32, a.shape, 1)
        e = jnp.where(idx < hw, e, 0.0)
    l_ref[...] = l_ref[...] * jnp.exp(m_prev - m_new) + jnp.sum(e, axis=1,
                                                                keepdims=True)
    m_ref[...] = m_new


# ----------------------------------------------------------------------------
# Pass 2 (streaming): per-tile normalize + fused output.
#   abund = exp(relu(w2@x+b2) - m) / l                (D, T)    -> written out
#   out   = clip(w1@x + endm@abund, 0, 1)             (Cout, T) -> written out
# ----------------------------------------------------------------------------
def _s2img_out_kernel(x_ref,      # (C1, T)
                      w1_ref,     # (Cout, C1)
                      w2_ref,     # (D, C1)
                      b2_ref,     # (D, 1)
                      endm_ref,   # (Cout, D)  hoisted net3(tf(relu(w1)))
                      m_ref,      # (D, 1)     global row max
                      l_ref,      # (D, 1)     global exp-sum
                      out_ref,    # (Cout, T)
                      abund_ref): # (D, T)
    x = x_ref[...]
    a = jnp.dot(w2_ref[...], x, preferred_element_type=jnp.float32)
    a = jnp.maximum(a + b2_ref[...], 0.0)                       # (D, T)

    inv_l = 1.0 / l_ref[...]                                    # exact, (D,1): cheap
    abund = jnp.exp(a - m_ref[...]) * inv_l                     # (D, T)
    abund_ref[...] = abund.astype(abund_ref.dtype)

    acc = jnp.dot(w1_ref[...], x, preferred_element_type=jnp.float32)    # (Cout, T)
    acc = acc + jnp.dot(endm_ref[...], abund, preferred_element_type=jnp.float32)
    out_ref[...] = jnp.clip(acc, 0.0, 1.0).astype(out_ref.dtype)


# ----------------------------------------------------------------------------
# Wrapper
# ----------------------------------------------------------------------------
def s2img_2stream_msi_forward(x1, params, *, tile_target=None,
                              out_dtype=jnp.float32, force_streaming=False):
    """x1: (1, C1, H, W) float32.  Returns ((1, Cout, H, W), (D, H*W))."""
    n, c1, h, w = x1.shape
    assert n == 1, "module's .view(c, h*w) implies batch == 1"
    hw = h * w
    cout = params["w1"].shape[0]
    d = c1 * (c1 + 1) // 2

    x_flat = x1.reshape(c1, hw).astype(jnp.float32)
    w1 = params["w1"].reshape(cout, c1).astype(jnp.float32)
    w2 = params["w2"].reshape(d, c1).astype(jnp.float32)
    b2 = params["b2"].reshape(d, 1).astype(jnp.float32)

    # ---- Hoisted, x-independent endmember branch (runs once in the wrapper) ----
    para = jnp.maximum(w1, 0.0)                                  # relu(conv1 weight)
    emb = _tf_bilinear(para)                                     # (Cout, D)
    hdd = jnp.maximum(emb @ params["w3a"].T + params["b3a"], 0.0)
    endm = jnp.maximum(hdd @ params["w3b"].T + params["b3b"], 0.0)   # (Cout, D)
    endm = endm.astype(jnp.float32)

    budget = _vmem_budget_bytes()
    out_isz = jnp.dtype(out_dtype).itemsize
    mm_flops_per_col = 2 * (d * c1 + cout * c1 + cout * d)

    # ---- Single-pass, whole-image-in-VMEM path (common case for MSI frames) ----
    single_bpc = 4 * (2 * (c1 + 2 * d + cout) + (d + cout))
    if (not force_streaming) and hw * single_bpc <= int(budget * 0.8):
        cost = pl.CostEstimate(
            flops=mm_flops_per_col * hw,
            transcendentals=d * hw,
            bytes_accessed=4 * c1 * hw + out_isz * (cout + d) * hw)
        out, abund = pl.pallas_call(
            _s2img_single_kernel,
            out_shape=(jax.ShapeDtypeStruct((cout, hw), out_dtype),
                       jax.ShapeDtypeStruct((d, hw), out_dtype)),
            grid=(1,),
            in_specs=[
                pl.BlockSpec((c1, hw), lambda i: (0, 0)),
                pl.BlockSpec((cout, c1), lambda i: (0, 0)),
                pl.BlockSpec((d, c1), lambda i: (0, 0)),
                pl.BlockSpec((d, 1), lambda i: (0, 0)),
                pl.BlockSpec((cout, d), lambda i: (0, 0)),
            ],
            out_specs=(pl.BlockSpec((cout, hw), lambda i: (0, 0)),
                       pl.BlockSpec((d, hw), lambda i: (0, 0))),
            compiler_params=pltpu.CompilerParams(
                dimension_semantics=("arbitrary",),
                vmem_limit_bytes=budget),
            cost_estimate=cost,
        )(x_flat, w1, w2, b2, endm)
        return out.reshape(1, cout, h, w), abund

    # ---- Two-pass streaming fallback for images that do not fit in VMEM ----
    tile, n_total, n_split, hw_pad = _plan_streaming(hw, c1, cout, d, budget,
                                                     tile_target)
    n_inner = n_total // n_split
    need_mask = hw_pad != hw
    x_pad = x_flat if not need_mask else jnp.pad(x_flat,
                                                 ((0, 0), (0, hw_pad - hw)))

    # Pass 1: per-half online softmax statistics, halves sharded across TCs.
    stats_kernel = functools.partial(_abund_stats_kernel, tile=tile, hw=hw,
                                     n_inner=n_inner, need_mask=need_mask)
    cost1 = pl.CostEstimate(
        flops=(2 * d * c1 + 6 * d) * hw_pad,
        transcendentals=d * hw_pad,
        bytes_accessed=4 * c1 * hw_pad)
    m_parts, l_parts = pl.pallas_call(
        stats_kernel,
        out_shape=(jax.ShapeDtypeStruct((n_split, d, 1), jnp.float32),
                   jax.ShapeDtypeStruct((n_split, d, 1), jnp.float32)),
        grid=(n_split, n_inner),
        in_specs=[
            pl.BlockSpec((c1, tile), lambda c, i: (0, c * n_inner + i)),
            pl.BlockSpec((d, c1), lambda c, i: (0, 0)),
            pl.BlockSpec((d, 1), lambda c, i: (0, 0)),
        ],
        out_specs=(pl.BlockSpec((None, d, 1), lambda c, i: (c, 0, 0)),
                   pl.BlockSpec((None, d, 1), lambda c, i: (c, 0, 0))),
        compiler_params=pltpu.CompilerParams(
            dimension_semantics=("parallel", "arbitrary"),
            vmem_limit_bytes=budget),
        cost_estimate=cost1,
    )(x_pad, w2, b2)

    # Merge per-half stats with a tiny log-sum-exp (wrapper side, (D,1) tensors).
    if n_split == 1:
        m_g, l_g = m_parts[0], l_parts[0]
    else:
        m_g = jnp.max(m_parts, axis=0)                                    # (D, 1)
        l_g = jnp.sum(l_parts * jnp.exp(m_parts - m_g[None]), axis=0)     # (D, 1)

    # Pass 2: normalize + fused out = clip(w1@x + endm@abund, 0, 1).
    cost2 = pl.CostEstimate(
        flops=mm_flops_per_col * hw_pad,
        transcendentals=d * hw_pad,
        bytes_accessed=4 * c1 * hw_pad + out_isz * (cout + d) * hw_pad)
    out, abund = pl.pallas_call(
        _s2img_out_kernel,
        out_shape=(jax.ShapeDtypeStruct((cout, hw_pad), out_dtype),
                   jax.ShapeDtypeStruct((d, hw_pad), out_dtype)),
        grid=(n_total,),
        in_specs=[
            pl.BlockSpec((c1, tile), lambda i: (0, i)),
            pl.BlockSpec((cout, c1), lambda i: (0, 0)),
            pl.BlockSpec((d, c1), lambda i: (0, 0)),
            pl.BlockSpec((d, 1), lambda i: (0, 0)),
            pl.BlockSpec((cout, d), lambda i: (0, 0)),
            pl.BlockSpec((d, 1), lambda i: (0, 0)),
            pl.BlockSpec((d, 1), lambda i: (0, 0)),
        ],
        out_specs=(pl.BlockSpec((cout, tile), lambda i: (0, i)),
                   pl.BlockSpec((d, tile), lambda i: (0, i))),
        compiler_params=pltpu.CompilerParams(
            dimension_semantics=("parallel",),
            vmem_limit_bytes=budget),
        cost_estimate=cost2,
    )(x_pad, w1, w2, b2, endm, m_g, l_g)

    if need_mask:
        out = out[:, :hw]
        abund = abund[:, :hw]
    return out.reshape(1, cout, h, w), abund


# ----------------------------------------------------------------------------
# Pure-JAX reference of the same forward (for correctness check)
# ----------------------------------------------------------------------------
def _reference(x1, params):
    n, c1, h, w = x1.shape
    hw = h * w
    cout = params["w1"].shape[0]
    d = c1 * (c1 + 1) // 2
    x_flat = x1.reshape(c1, hw)
    w1 = params["w1"].reshape(cout, c1)
    w2 = params["w2"].reshape(d, c1)
    b2 = params["b2"].reshape(d, 1)

    out1 = w1 @ x_flat
    para = jnp.maximum(w1, 0.0)
    emb = _tf_bilinear(para)
    hdd = jnp.maximum(emb @ params["w3a"].T + params["b3a"], 0.0)
    endm = jnp.maximum(hdd @ params["w3b"].T + params["b3b"], 0.0)
    a = jnp.maximum(w2 @ x_flat + b2, 0.0)
    abund = jax.nn.softmax(a, axis=1)
    out2 = endm @ abund
    return jnp.clip(out1 + out2, 0.0, 1.0).reshape(1, cout, h, w), abund


if __name__ == "__main__":
    # Small shapes: input_c1=4, output_c=8, batch=1 (required by the module).
    C1, COUT = 4, 8
    D = C1 * (C1 + 1) // 2          # 10
    D2 = C1 * (C1 + 1)              # 20

    key = jax.random.PRNGKey(0)
    ks = jax.random.split(key, 7)
    params = {
        "w1":  0.3 * jax.random.normal(ks[0], (COUT, C1, 1, 1), jnp.float32),
        "w2":  0.3 * jax.random.normal(ks[1], (D, C1, 1, 1), jnp.float32),
        "b2":  0.1 * jax.random.normal(ks[2], (D,), jnp.float32),
        "w3a": 0.3 * jax.random.normal(ks[3], (D2, D), jnp.float32),  # Linear(D, 2D).weight
        "b3a": 0.1 * jax.random.normal(ks[4], (D2,), jnp.float32),
        "w3b": 0.3 * jax.random.normal(ks[5], (D, D2), jnp.float32),  # Linear(2D, D).weight
        "b3b": 0.1 * jnp.ones((D,), jnp.float32),
    }

    def _check(h, w, **kwargs):
        x1 = jax.random.uniform(ks[6], (1, C1, h, w), jnp.float32)
        out, abund = s2img_2stream_msi_forward(x1, params, **kwargs)
        jax.block_until_ready((out, abund))
        ref_out, ref_abund = _reference(x1, params)
        np.testing.assert_allclose(np.asarray(out), np.asarray(ref_out),
                                   rtol=1e-3, atol=1e-5)
        np.testing.assert_allclose(np.asarray(abund), np.asarray(ref_abund),
                                   rtol=1e-3, atol=1e-5)

    # 1) Default dispatch: whole image fits in VMEM -> single-pass kernel.
    _check(32, 32)
    # 2) Forced streaming path: two-pass online softmax, pass 1 split across 2 TCs.
    _check(32, 32, force_streaming=True, tile_target=256)
    # 3) HW not a multiple of 128 -> wrapper padding + in-kernel softmax mask.
    _check(30, 36, force_streaming=True, tile_target=256)

    print("KERNEL_OK")
</pallas_src>

<mosaic_0001>
module attributes {stable_mosaic.version = 11 : i64} {
  func.func @_s2img_single_kernel(%arg0: i32, %arg1: memref<4x1024xf32, #tpu.memory_space<vmem>>, %arg2: memref<8x4xf32, #tpu.memory_space<vmem>>, %arg3: memref<10x4xf32, #tpu.memory_space<vmem>>, %arg4: memref<10x1xf32, #tpu.memory_space<vmem>>, %arg5: memref<8x10xf32, #tpu.memory_space<vmem>>, %arg6: memref<8x1024xf32, #tpu.memory_space<vmem>>, %arg7: memref<10x1024xf32, #tpu.memory_space<vmem>>) attributes {dimension_semantics = [#tpu.dimension_semantics<arbitrary>], iteration_bounds = array<i64: 1>, scalar_prefetch = 0 : i64, scratch_operands = 0 : i64, tpu.core_type = #tpu.core_type<tc>, window_params = [{pipeline_mode = #tpu.pipeline_mode<synchronous>, transform_indices = @transform_0, window_bounds = array<i64: 4, 1024>}, {pipeline_mode = #tpu.pipeline_mode<synchronous>, transform_indices = @transform_1, window_bounds = array<i64: 8, 4>}, {pipeline_mode = #tpu.pipeline_mode<synchronous>, transform_indices = @transform_2, window_bounds = array<i64: 10, 4>}, {pipeline_mode = #tpu.pipeline_mode<synchronous>, transform_indices = @transform_3, window_bounds = array<i64: 10, 1>}, {pipeline_mode = #tpu.pipeline_mode<synchronous>, transform_indices = @transform_4, window_bounds = array<i64: 8, 10>}, {pipeline_mode = #tpu.pipeline_mode<synchronous>, transform_indices = @transform_5, window_bounds = array<i64: 8, 1024>}, {pipeline_mode = #tpu.pipeline_mode<synchronous>, transform_indices = @transform_6, window_bounds = array<i64: 10, 1024>}]} {
    %c0 = arith.constant 0 : index
    %c0_0 = arith.constant 0 : index
    %0 = vector.load %arg1[%c0, %c0_0] : memref<4x1024xf32, #tpu.memory_space<vmem>>, vector<4x1024xf32>
    %c0_1 = arith.constant 0 : index
    %c0_2 = arith.constant 0 : index
    %1 = vector.load %arg3[%c0_1, %c0_2] : memref<10x4xf32, #tpu.memory_space<vmem>>, vector<10x4xf32>
    %cst = arith.constant dense<0.000000e+00> : vector<10x1024xf32>
    %2 = tpu.matmul %1, %0, %cst {dimension_numbers = #tpu.dot_dimension_numbers<[1], [0], [0], [1], [0, 0, 1, 1], [], []>} : vector<10x4xf32>, vector<4x1024xf32>, vector<10x1024xf32> -> vector<10x1024xf32>
    %c0_3 = arith.constant 0 : index
    %c0_4 = arith.constant 0 : index
    %3 = vector.load %arg4[%c0_3, %c0_4] : memref<10x1xf32, #tpu.memory_space<vmem>>, vector<10x1xf32>
    %4 = vector.broadcast %3 : vector<10x1xf32> to vector<10x1024xf32>
    %5 = arith.addf %2, %4 : vector<10x1024xf32>
    %cst_5 = arith.constant 0.000000e+00 : f32
    %6 = vector.broadcast %cst_5 : f32 to vector<10x1024xf32>
    %7 = arith.maximumf %5, %6 : vector<10x1024xf32>
    %cst_6 = arith.constant dense<0xFF800000> : vector<10xf32>
    %8 = vector.multi_reduction <maximumf>, %7, %cst_6 [1] : vector<10x1024xf32> to vector<10xf32>
    %9 = vector.shape_cast %8 : vector<10xf32> to vector<10x1xf32>
    %10 = vector.broadcast %9 : vector<10x1xf32> to vector<10x1024xf32>
    %11 = arith.subf %7, %10 : vector<10x1024xf32>
    %12 = math.exp %11 : vector<10x1024xf32>
    %cst_7 = arith.constant dense<0.000000e+00> : vector<10xf32>
    %13 = vector.multi_reduction <add>, %12, %cst_7 [1] : vector<10x1024xf32> to vector<10xf32>
    %14 = vector.shape_cast %13 : vector<10xf32> to vector<10x1xf32>
    %cst_8 = arith.constant 1.000000e+00 : f32
    %15 = vector.broadcast %cst_8 : f32 to vector<10x1xf32>
    %16 = arith.divf %15, %14 : vector<10x1xf32>
    %17 = vector.broadcast %16 : vector<10x1xf32> to vector<10x1024xf32>
    %18 = arith.mulf %12, %17 : vector<10x1024xf32>
    %c0_9 = arith.constant 0 : index
    %c0_10 = arith.constant 0 : index
    %19 = vector.load %arg7[%c0_9, %c0_10] : memref<10x1024xf32, #tpu.memory_space<vmem>>, vector<10x1024xf32>
    tpu.vector_store %arg7[%c0_9, %c0_10], %18 {strides = array<i32>} : memref<10x1024xf32, #tpu.memory_space<vmem>>, vector<10x1024xf32>,
    %c0_11 = arith.constant 0 : index
    %c0_12 = arith.constant 0 : index
    %20 = vector.load %arg2[%c0_11, %c0_12] : memref<8x4xf32, #tpu.memory_space<vmem>>, vector<8x4xf32>
    %cst_13 = arith.constant dense<0.000000e+00> : vector<8x1024xf32>
    %21 = tpu.matmul %20, %0, %cst_13 {dimension_numbers = #tpu.dot_dimension_numbers<[1], [0], [0], [1], [0, 0, 1, 1], [], []>} : vector<8x4xf32>, vector<4x1024xf32>, vector<8x1024xf32> -> vector<8x1024xf32>
    %c0_14 = arith.constant 0 : index
    %c0_15 = arith.constant 0 : index
    %22 = vector.load %arg5[%c0_14, %c0_15] : memref<8x10xf32, #tpu.memory_space<vmem>>, vector<8x10xf32>
    %cst_16 = arith.constant dense<0.000000e+00> : vector<8x1024xf32>
    %23 = tpu.matmul %22, %18, %cst_16 {dimension_numbers = #tpu.dot_dimension_numbers<[1], [0], [0], [1], [0, 0, 1, 1], [], []>} : vector<8x10xf32>, vector<10x1024xf32>, vector<8x1024xf32> -> vector<8x1024xf32>
    %24 = arith.addf %21, %23 : vector<8x1024xf32>
    %cst_17 = arith.constant 0.000000e+00 : f32
    %cst_18 = arith.constant 1.000000e+00 : f32
    %25 = vector.broadcast %cst_17 : f32 to vector<8x1024xf32>
    %26 = arith.maximumf %25, %24 : vector<8x1024xf32>
    %27 = vector.broadcast %cst_18 : f32 to vector<8x1024xf32>
    %28 = arith.minimumf %27, %26 : vector<8x1024xf32>
    %c0_19 = arith.constant 0 : index
    %c0_20 = arith.constant 0 : index
    %29 = vector.load %arg6[%c0_19, %c0_20] : memref<8x1024xf32, #tpu.memory_space<vmem>>, vector<8x1024xf32>
    tpu.vector_store %arg6[%c0_19, %c0_20], %28 {strides = array<i32>} : memref<8x1024xf32, #tpu.memory_space<vmem>>, vector<8x1024xf32>,
    return
  }
  func.func @transform_0(%arg0: i32) -> (i32, i32) {
    %c0_i32 = arith.constant 0 : i32
    %c0_i32_0 = arith.constant 0 : i32
    %c0_i32_1 = arith.constant 0 : i32
    return %c0_i32, %c0_i32_0 : i32, i32
  }
  func.func @transform_1(%arg0: i32) -> (i32, i32) {
    %c0_i32 = arith.constant 0 : i32
    %c0_i32_0 = arith.constant 0 : i32
    %c0_i32_1 = arith.constant 0 : i32
    return %c0_i32, %c0_i32_0 : i32, i32
  }
  func.func @transform_2(%arg0: i32) -> (i32, i32) {
    %c0_i32 = arith.constant 0 : i32
    %c0_i32_0 = arith.constant 0 : i32
    %c0_i32_1 = arith.constant 0 : i32
    return %c0_i32, %c0_i32_0 : i32, i32
  }
  func.func @transform_3(%arg0: i32) -> (i32, i32) {
    %c0_i32 = arith.constant 0 : i32
    %c0_i32_0 = arith.constant 0 : i32
    %c0_i32_1 = arith.constant 0 : i32
    return %c0_i32, %c0_i32_0 : i32, i32
  }
  func.func @transform_4(%arg0: i32) -> (i32, i32) {
    %c0_i32 = arith.constant 0 : i32
    %c0_i32_0 = arith.constant 0 : i32
    %c0_i32_1 = arith.constant 0 : i32
    return %c0_i32, %c0_i32_0 : i32, i32
  }
  func.func @transform_5(%arg0: i32) -> (i32, i32) {
    %c0_i32 = arith.constant 0 : i32
    %c0_i32_0 = arith.constant 0 : i32
    %c0_i32_1 = arith.constant 0 : i32
    return %c0_i32, %c0_i32_0 : i32, i32
  }
  func.func @transform_6(%arg0: i32) -> (i32, i32) {
    %c0_i32 = arith.constant 0 : i32
    %c0_i32_0 = arith.constant 0 : i32
    %c0_i32_1 = arith.constant 0 : i32
    return %c0_i32, %c0_i32_0 : i32, i32
  }
}

</mosaic_0001>

<llo_original>
// kernel: tpu_custom_call.1
$region0: #{tpu_custom_call.1}
  #allocation0 [shape = 'u32[]', space=smem, size = 0x4, offset = 0x4, fixed_abs, tag = 'smem constant byte address 0x4 - core index']
  #allocation1 [shape = 'u32[72,128]{1,0:T(1,128)}', space=vmem, size = 0x9000, scoped, tag = 'internal scratch']
  %s0 = inlined_call_operand.vmem [shape: f32[4,1024], index: 0, kind: input, shape index: {}]
  %s1 = inlined_call_operand.vmem [shape: f32[8,4], index: 1, kind: input, shape index: {}]
  %s2 = inlined_call_operand.vmem [shape: f32[10,4], index: 2, kind: input, shape index: {}]
  %s3 = inlined_call_operand.vmem [shape: f32[10,1], index: 3, kind: input, shape index: {}]
  %s4 = inlined_call_operand.vmem [shape: f32[8,10], index: 4, kind: input, shape index: {}]
  %s5 = inlined_call_operand.hbm [shape: f32[8,1024], index: 5, kind: output, shape index: {0}]
  %s6 = inlined_call_operand.hbm [shape: f32[10,1024], index: 6, kind: output, shape index: {1}]
  %7 = xla_tuple %s5, %s6
  %s8 = sld [smem:[#allocation0]]
  $region38: #{tpu_custom_call.1} parent=0
    _
  %s10 = ssub.s32 1, %s8
  %s11 = scalar_select 0, %s10, %s8
  $region1: #{tpu_custom_call.1} parent=0
    #allocation2 [shape = 'u8[32768]{0}', space=vmem, size = 0x8000, scoped, tag = 'output window, operand 0, single buffered']
    #allocation3 [shape = 's32[1]{0}', space=sflag, size = 0x4, scoped, tag = 'scoped memory for tpu_custom_call.1']
    #allocation4 [shape = 'u8[65536]{0}', space=vmem, size = 0x10000, scoped, tag = 'output window, operand 1, single buffered']
    #allocation5 [shape = 's32[1]{0}', space=sflag, size = 0x4, scoped, tag = 'scoped memory for tpu_custom_call.1']
    %12 = vsyncpa [#allocation3], 0
    %13 = vsyncpa [#allocation5], 0
    // Predicated region
    $region2: #{tpu_custom_call.1} parent=1 // pred_check
      _
    $region3: #{tpu_custom_call.1} parent=1 // pred_check_branch
      %15 = sbr.rel (0) target = $region5
    $region4: #{tpu_custom_call.1} parent=1 // pred_region
      _
    $region5: #{tpu_custom_call.1} parent=1 // pred_fallthru
      _
    // Predicated region
    $region6: #{tpu_custom_call.1} parent=1 // pred_check
      _
    $region7: #{tpu_custom_call.1} parent=1 // pred_check_branch
      %17 = sbr.rel (0) target = $region9
    $region8: #{tpu_custom_call.1} parent=1 // pred_region
      _
    $region9: #{tpu_custom_call.1} parent=1 // pred_fallthru
      _
    // Predicated region
    $region10: #{tpu_custom_call.1} parent=1 // pred_check
      _
    $region11: #{tpu_custom_call.1} parent=1 // pred_check_branch
      %19 = sbr.rel (0) target = $region13
    $region12: #{tpu_custom_call.1} parent=1 // pred_region
      _
    $region13: #{tpu_custom_call.1} parent=1 // pred_fallthru
      _
    // Predicated region
    $region14: #{tpu_custom_call.1} parent=1 // pred_check
      _
    $region15: #{tpu_custom_call.1} parent=1 // pred_check_branch
      %21 = sbr.rel (0) target = $region17
    $region16: #{tpu_custom_call.1} parent=1 // pred_region
      _
    $region17: #{tpu_custom_call.1} parent=1 // pred_fallthru
      _
    // Predicated region
    $region18: #{tpu_custom_call.1} parent=1 // pred_check
      _
    $region19: #{tpu_custom_call.1} parent=1 // pred_check_branch
      %23 = sbr.rel (0) target = $region21
    $region20: #{tpu_custom_call.1} parent=1 // pred_region
      _
    $region21: #{tpu_custom_call.1} parent=1 // pred_fallthru
      _
    %v24 = vld [vmem:[%s0] sm:$0xff]
    %v25 = vld [vmem:[%s0 + $0x8] sm:$0xff]
    %v26 = vld [vmem:[%s0 + $0x10] sm:$0xff]
    %v27 = vld [vmem:[%s0 + $0x18] sm:$0xff]
    %v28 = vld [vmem:[%s2] sm:$0xff]
    %v29 = vld [vmem:[%s2 + $0x8] sm:$0x3]
    %v30 = vld [vmem:[%s3] sm:$0xff]
    %v31 = vld [vmem:[%s3 + $0x8] sm:$0x3]
    %33 = vset.pattern.permute.xlu0 0
    %34 = vperm.xlu0 %33, %v30
    %v35 = vpop.permute.xlu0 %34
    %38 = vset.pattern.permute.xlu0 0
    %39 = vperm.xlu0 %38, %v31
    %v40 = vpop.permute.xlu0 %39
    %46 = vst [vmem:[#allocation1] ss:$2 sm:$0xff] %v24
    %s47 = scalar_lea.vmem [#allocation1], 16
    %48 = vst [vmem:[%s47] ss:$2 sm:$0xff] %v25
    %s49 = scalar_lea.vmem [#allocation1], 32
    %50 = vst [vmem:[%s49] ss:$2 sm:$0xff] %v26
    %s51 = scalar_lea.vmem [#allocation1], 48
    %52 = vst [vmem:[%s51] ss:$2 sm:$0xff] %v27
    %v53 = vld.sshfl [vmem:[#allocation1] sm:$0xff pattern:$0x75316420]
    %v54 = vld.sshfl [vmem:[#allocation1 + $0x8] sm:$0xff pattern:$0x75316420]
    %v55 = vld.sshfl [vmem:[#allocation1 + $0x10] sm:$0xff pattern:$0x75316420]
    %v56 = vld.sshfl [vmem:[#allocation1 + $0x18] sm:$0xff pattern:$0x75316420]
    %v57 = vld.sshfl [vmem:[#allocation1 + $0x20] sm:$0xff pattern:$0x75316420]
    %v58 = vld.sshfl [vmem:[#allocation1 + $0x28] sm:$0xff pattern:$0x75316420]
    %v59 = vld.sshfl [vmem:[#allocation1 + $0x30] sm:$0xff pattern:$0x75316420]
    %v60 = vld.sshfl [vmem:[#allocation1 + $0x38] sm:$0xff pattern:$0x75316420]
    %vm61 = vcmask 31744
    %v63 = vsel %vm61, %v28, 0
    %v66 = vsel %vm61, %v29, 0
    %vm68 = vcmask 1043456
    %v69 = vsel %vm68, %v53, 0
    %v71 = vsel %vm68, %v54, 0
    %v73 = vsel %vm68, %v55, 0
    %v75 = vsel %vm68, %v56, 0
    %v77 = vsel %vm68, %v57, 0
    %v79 = vsel %vm68, %v58, 0
    %v81 = vsel %vm68, %v59, 0
    %v83 = vsel %vm68, %v60, 0
    %85 = vmatpush.msra.mxu0 0.0
    %86 = vmatpush.msra.mxu0 0.0
    %87 = vmatpush.msra.mxu0 0.0
    %88 = vmatpush.msra.mxu0 0.0
    %89 = vmatpush.msra.mxu0 0.0
    %90 = vmatpush.msra.mxu0 0.0
    %91 = vmatpush.msra.mxu0 0.0
    %92 = vmatpush.msra.mxu0 0.0
    %93 = vmatpush.msra.mxu0 0.0
    %94 = vmatpush.msra.mxu0 0.0
    %95 = vmatpush.msra.mxu0 0.0
    %96 = vmatpush.msra.mxu0 0.0
    %97 = vmatpush.msra.mxu0 0.0
    %98 = vmatpush.msra.mxu0 0.0
    %99 = vmatpush.msra.mxu0 0.0
    %100 = vmatpush.msra.mxu0 %v69
    %101 = vmatmul.f32.gmra.mxu0 %v63
    %v102 = vpop.f32.mrf.mxu0
    %v103 = vadd.f32 %v35, %v102
    %104 = vmatmul.f32.gmra.mxu0 %v66
    %v105 = vpop.f32.mrf.mxu0
    %v106 = vadd.f32 %v40, %v105
    %107 = vdwg.mxu0
    %108 = vmatpush.msra.mxu0 0.0
    %109 = vmatpush.msra.mxu0 0.0
    %110 = vmatpush.msra.mxu0 0.0
    %111 = vmatpush.msra.mxu0 0.0
    %112 = vmatpush.msra.mxu0 0.0
    %113 = vmatpush.msra.mxu0 0.0
    %114 = vmatpush.msra.mxu0 0.0
    %115 = vmatpush.msra.mxu0 0.0
    %116 = vmatpush.msra.mxu0 0.0
    %117 = vmatpush.msra.mxu0 0.0
    %118 = vmatpush.msra.mxu0 0.0
    %119 = vmatpush.msra.mxu0 0.0
    %120 = vmatpush.msra.mxu0 0.0
    %121 = vmatpush.msra.mxu0 0.0
    %122 = vmatpush.msra.mxu0 0.0
    %123 = vmatpush.msra.mxu0 %v71
    %124 = vmatmul.f32.gmra.mxu0 %v63
    %v125 = vpop.f32.mrf.mxu0
    %v126 = vadd.f32 %v35, %v125
    %127 = vmatmul.f32.gmra.mxu0 %v66
    %v128 = vpop.f32.mrf.mxu0
    %v129 = vadd.f32 %v40, %v128
    %130 = vdwg.mxu0
    %131 = vmatpush.msra.mxu0 0.0
    %132 = vmatpush.msra.mxu0 0.0
    %133 = vmatpush.msra.mxu0 0.0
    %134 = vmatpush.msra.mxu0 0.0
    %135 = vmatpush.msra.mxu0 0.0
    %136 = vmatpush.msra.mxu0 0.0
    %137 = vmatpush.msra.mxu0 0.0
    %138 = vmatpush.msra.mxu0 0.0
    %139 = vmatpush.msra.mxu0 0.0
    %140 = vmatpush.msra.mxu0 0.0
    %141 = vmatpush.msra.mxu0 0.0
    %142 = vmatpush.msra.mxu0 0.0
    %143 = vmatpush.msra.mxu0 0.0
    %144 = vmatpush.msra.mxu0 0.0
    %145 = vmatpush.msra.mxu0 0.0
    %146 = vmatpush.msra.mxu0 %v73
    %147 = vmatmul.f32.gmra.mxu0 %v63
    %v148 = vpop.f32.mrf.mxu0
    %v149 = vadd.f32 %v35, %v148
    %150 = vmatmul.f32.gmra.mxu0 %v66
    %v151 = vpop.f32.mrf.mxu0
    %v152 = vadd.f32 %v40, %v151
    %153 = vdwg.mxu0
    %154 = vmatpush.msra.mxu0 0.0
    %155 = vmatpush.msra.mxu0 0.0
    %156 = vmatpush.msra.mxu0 0.0
    %157 = vmatpush.msra.mxu0 0.0
    %158 = vmatpush.msra.mxu0 0.0
    %159 = vmatpush.msra.mxu0 0.0
    %160 = vmatpush.msra.mxu0 0.0
    %161 = vmatpush.msra.mxu0 0.0
    %162 = vmatpush.msra.mxu0 0.0
    %163 = vmatpush.msra.mxu0 0.0
    %164 = vmatpush.msra.mxu0 0.0
    %165 = vmatpush.msra.mxu0 0.0
    %166 = vmatpush.msra.mxu0 0.0
    %167 = vmatpush.msra.mxu0 0.0
    %168 = vmatpush.msra.mxu0 0.0
    %169 = vmatpush.msra.mxu0 %v75
    %170 = vmatmul.f32.gmra.mxu0 %v63
    %v171 = vpop.f32.mrf.mxu0
    %v172 = vadd.f32 %v35, %v171
    %173 = vmatmul.f32.gmra.mxu0 %v66
    %v174 = vpop.f32.mrf.mxu0
    %v175 = vadd.f32 %v40, %v174
    %176 = vdwg.mxu0
    %177 = vmatpush.msra.mxu0 0.0
    %178 = vmatpush.msra.mxu0 0.0
    %179 = vmatpush.msra.mxu0 0.0
    %180 = vmatpush.msra.mxu0 0.0
    %181 = vmatpush.msra.mxu0 0.0
    %182 = vmatpush.msra.mxu0 0.0
    %183 = vmatpush.msra.mxu0 0.0
    %184 = vmatpush.msra.mxu0 0.0
    %185 = vmatpush.msra.mxu0 0.0
    %186 = vmatpush.msra.mxu0 0.0
    %187 = vmatpush.msra.mxu0 0.0
    %188 = vmatpush.msra.mxu0 0.0
    %189 = vmatpush.msra.mxu0 0.0
    %190 = vmatpush.msra.mxu0 0.0
    %191 = vmatpush.msra.mxu0 0.0
    %192 = vmatpush.msra.mxu0 %v77
    %193 = vmatmul.f32.gmra.mxu0 %v63
    %v194 = vpop.f32.mrf.mxu0
    %v195 = vadd.f32 %v35, %v194
    %196 = vmatmul.f32.gmra.mxu0 %v66
    %v197 = vpop.f32.mrf.mxu0
    %v198 = vadd.f32 %v40, %v197
    %199 = vdwg.mxu0
    %200 = vmatpush.msra.mxu0 0.0
    %201 = vmatpush.msra.mxu0 0.0
    %202 = vmatpush.msra.mxu0 0.0
    %203 = vmatpush.msra.mxu0 0.0
    %204 = vmatpush.msra.mxu0 0.0
    %205 = vmatpush.msra.mxu0 0.0
    %206 = vmatpush.msra.mxu0 0.0
    %207 = vmatpush.msra.mxu0 0.0
    %208 = vmatpush.msra.mxu0 0.0
    %209 = vmatpush.msra.mxu0 0.0
    %210 = vmatpush.msra.mxu0 0.0
    %211 = vmatpush.msra.mxu0 0.0
    %212 = vmatpush.msra.mxu0 0.0
    %213 = vmatpush.msra.mxu0 0.0
    %214 = vmatpush.msra.mxu0 0.0
    %215 = vmatpush.msra.mxu0 %v79
    %216 = vmatmul.f32.gmra.mxu0 %v63
    %v217 = vpop.f32.mrf.mxu0
    %v218 = vadd.f32 %v35, %v217
    %219 = vmatmul.f32.gmra.mxu0 %v66
    %v220 = vpop.f32.mrf.mxu0
    %v221 = vadd.f32 %v40, %v220
    %222 = vdwg.mxu0
    %223 = vmatpush.msra.mxu0 0.0
    %224 = vmatpush.msra.mxu0 0.0
    %225 = vmatpush.msra.mxu0 0.0
    %226 = vmatpush.msra.mxu0 0.0
    %227 = vmatpush.msra.mxu0 0.0
    %228 = vmatpush.msra.mxu0 0.0
    %229 = vmatpush.msra.mxu0 0.0
    %230 = vmatpush.msra.mxu0 0.0
    %231 = vmatpush.msra.mxu0 0.0
    %232 = vmatpush.msra.mxu0 0.0
    %233 = vmatpush.msra.mxu0 0.0
    %234 = vmatpush.msra.mxu0 0.0
    %235 = vmatpush.msra.mxu0 0.0
    %236 = vmatpush.msra.mxu0 0.0
    %237 = vmatpush.msra.mxu0 0.0
    %238 = vmatpush.msra.mxu0 %v81
    %239 = vmatmul.f32.gmra.mxu0 %v63
    %v240 = vpop.f32.mrf.mxu0
    %v241 = vadd.f32 %v35, %v240
    %242 = vmatmul.f32.gmra.mxu0 %v66
    %v243 = vpop.f32.mrf.mxu0
    %v244 = vadd.f32 %v40, %v243
    %245 = vdwg.mxu0
    %246 = vmatpush.msra.mxu0 0.0
    %247 = vmatpush.msra.mxu0 0.0
    %248 = vmatpush.msra.mxu0 0.0
    %249 = vmatpush.msra.mxu0 0.0
    %250 = vmatpush.msra.mxu0 0.0
    %251 = vmatpush.msra.mxu0 0.0
    %252 = vmatpush.msra.mxu0 0.0
    %253 = vmatpush.msra.mxu0 0.0
    %254 = vmatpush.msra.mxu0 0.0
    %255 = vmatpush.msra.mxu0 0.0
    %256 = vmatpush.msra.mxu0 0.0
    %257 = vmatpush.msra.mxu0 0.0
    %258 = vmatpush.msra.mxu0 0.0
    %259 = vmatpush.msra.mxu0 0.0
    %260 = vmatpush.msra.mxu0 0.0
    %261 = vmatpush.msra.mxu0 %v83
    %262 = vmatmul.f32.gmra.mxu0 %v63
    %v263 = vpop.f32.mrf.mxu0
    %v264 = vadd.f32 %v35, %v263
    %265 = vmatmul.f32.gmra.mxu0 %v66
    %v266 = vpop.f32.mrf.mxu0
    %v267 = vadd.f32 %v40, %v266
    %268 = vdwg.mxu0
    %v269 = vmax.f32 %v103, 0.0
    %v270 = vmax.f32 %v126, 0.0
    %v271 = vmax.f32 %v149, 0.0
    %v272 = vmax.f32 %v172, 0.0
    %v273 = vmax.f32 %v195, 0.0
    %v274 = vmax.f32 %v218, 0.0
    %v275 = vmax.f32 %v241, 0.0
    %v276 = vmax.f32 %v264, 0.0
    %v277 = vmax.f32 %v106, 0.0
    %v278 = vmax.f32 %v129, 0.0
    %v279 = vmax.f32 %v152, 0.0
    %v280 = vmax.f32 %v175, 0.0
    %v281 = vmax.f32 %v198, 0.0
    %v282 = vmax.f32 %v221, 0.0
    %v283 = vmax.f32 %v244, 0.0
    %v284 = vmax.f32 %v267, 0.0
    %v285 = vmax.f32 %v269, %v271
    %v286 = vmax.f32 %v270, %v272
    %v287 = vmax.f32 %v285, %v273
    %v288 = vmax.f32 %v286, %v274
    %v289 = vmax.f32 %v287, %v275
    %v290 = vmax.f32 %v288, %v276
    %v291 = vmax.f32 %v289, %v290
    %292 = vmax.xlane.f32.xlu0 %v291
    %v293 = vpop.xlane.xlu0 %292
    %vm294 = vcmask 1041408
    %v295 = vsel %vm294, %v277, -inf
    %v296 = vsel %vm294, %v278, -inf
    %v297 = vsel %vm294, %v279, -inf
    %v298 = vmax.f32 %v295, %v297
    %v299 = vsel %vm294, %v280, -inf
    %v300 = vmax.f32 %v296, %v299
    %v301 = vsel %vm294, %v281, -inf
    %v302 = vmax.f32 %v298, %v301
    %v303 = vsel %vm294, %v282, -inf
    %v304 = vmax.f32 %v300, %v303
    %v305 = vsel %vm294, %v283, -inf
    %v306 = vmax.f32 %v302, %v305
    %v307 = vsel %vm294, %v284, -inf
    %v308 = vmax.f32 %v304, %v307
    %v309 = vmax.f32 %v306, %v308
    %310 = vmax.xlane.f32.xlu0 %v309
    %v311 = vpop.xlane.xlu0 %310
    %v312 = vsub.f32 %v269, %v293
    %v313 = vsub.f32 %v270, %v293
    %v314 = vsub.f32 %v271, %v293
    %v315 = vsub.f32 %v272, %v293
    %v316 = vsub.f32 %v273, %v293
    %v317 = vsub.f32 %v274, %v293
    %v318 = vsub.f32 %v275, %v293
    %v319 = vsub.f32 %v276, %v293
    %v320 = vsub.f32 %v277, %v311
    %v321 = vsub.f32 %v278, %v311
    %v322 = vsub.f32 %v279, %v311
    %v323 = vsub.f32 %v280, %v311
    %v324 = vsub.f32 %v281, %v311
    %v325 = vsub.f32 %v282, %v311
    %v326 = vsub.f32 %v283, %v311
    %v327 = vsub.f32 %v284, %v311
    %v328 = vmul.f32 %v312, 1.442695
    %v329 = vpow.pop %v328
    %v330 = vmul.f32 %v313, 1.442695
    %v331 = vpow.pop %v330
    %v332 = vmul.f32 %v314, 1.442695
    %v333 = vpow.pop %v332
    %v334 = vmul.f32 %v315, 1.442695
    %v335 = vpow.pop %v334
    %v336 = vmul.f32 %v316, 1.442695
    %v337 = vpow.pop %v336
    %v338 = vmul.f32 %v317, 1.442695
    %v339 = vpow.pop %v338
    %v340 = vmul.f32 %v318, 1.442695
    %v341 = vpow.pop %v340
    %v342 = vmul.f32 %v319, 1.442695
    %v343 = vpow.pop %v342
    %v344 = vmul.f32 %v320, 1.442695
    %v345 = vpow.pop %v344
    %v346 = vmul.f32 %v321, 1.442695
    %v347 = vpow.pop %v346
    %v348 = vmul.f32 %v322, 1.442695
    %v349 = vpow.pop %v348
    %v350 = vmul.f32 %v323, 1.442695
    %v351 = vpow.pop %v350
    %v352 = vmul.f32 %v324, 1.442695
    %v353 = vpow.pop %v352
    %v354 = vmul.f32 %v325, 1.442695
    %v355 = vpow.pop %v354
    %v356 = vmul.f32 %v326, 1.442695
    %v357 = vpow.pop %v356
    %v358 = vmul.f32 %v327, 1.442695
    %v359 = vpow.pop %v358
    %v360 = vadd.f32 %v329, %v331
    %v361 = vadd.f32 %v360, %v333
    %v362 = vadd.f32 %v361, %v335
    %v363 = vadd.f32 %v362, %v337
    %v364 = vadd.f32 %v363, %v339
    %v365 = vadd.f32 %v364, %v341
    %v366 = vadd.f32 %v365, %v343
    %367 = vadd.xlane.f32.xlu0 %v366
    %v368 = vpop.xlane.xlu0 %367
    %v369 = vsel %vm294, %v345, 0.0
    %v370 = vsel %vm294, %v347, 0.0
    %v371 = vadd.f32 %v369, %v370
    %v372 = vsel %vm294, %v349, 0.0
    %v373 = vadd.f32 %v371, %v372
    %v374 = vsel %vm294, %v351, 0.0
    %v375 = vadd.f32 %v373, %v374
    %v376 = vsel %vm294, %v353, 0.0
    %v377 = vadd.f32 %v375, %v376
    %v378 = vsel %vm294, %v355, 0.0
    %v379 = vadd.f32 %v377, %v378
    %v380 = vsel %vm294, %v357, 0.0
    %v381 = vadd.f32 %v379, %v380
    %v382 = vsel %vm294, %v359, 0.0
    %v383 = vadd.f32 %v381, %v382
    %384 = vadd.xlane.f32.xlu0 %v383
    %v385 = vpop.xlane.xlu0 %384
    %v386 = vrcp.pop %v368
    %v387 = vmul.f32 %v368, %v386
    %v388 = vsub.f32 1.0, %v387
    %v389 = vmul.f32 %v386, %v388
    %v390 = vadd.f32 %v386, %v389
    %vm391 = vweird.f32 %v368
    %vm392 = vweird.f32 %v386
    %vm393 = vmor %vm391, %vm392
    %v394 = vsel %vm393, %v386, %v390
    %v395 = vand.u32 2147483647, %v368
    %vm396 = vcmp.eq.f32.partialorder %v395, 8.507059e+37
    %v397 = vand.u32 %v368, 2147483648
    %v398 = vor.u32 1.1754944e-38, %v397
    %v399 = vsel %vm396, %v398, %v394
    %v400 = vmul.f32 1.0, %v399
    %v401 = vrcp.pop %v385
    %v402 = vmul.f32 %v385, %v401
    %v403 = vsub.f32 1.0, %v402
    %v404 = vmul.f32 %v401, %v403
    %v405 = vadd.f32 %v401, %v404
    %vm406 = vweird.f32 %v385
    %vm407 = vweird.f32 %v401
    %vm408 = vmor %vm406, %vm407
    %v409 = vsel %vm408, %v401, %v405
    %v410 = vand.u32 2147483647, %v385
    %vm411 = vcmp.eq.f32.partialorder %v410, 8.507059e+37
    %v412 = vand.u32 %v385, 2147483648
    %v413 = vor.u32 1.1754944e-38, %v412
    %v414 = vsel %vm411, %v413, %v409
    %v415 = vmul.f32 1.0, %v414
    %v416 = vmul.f32 %v329, %v400
    %v417 = vmul.f32 %v331, %v400
    %v418 = vmul.f32 %v333, %v400
    %v419 = vmul.f32 %v335, %v400
    %v420 = vmul.f32 %v337, %v400
    %v421 = vmul.f32 %v339, %v400
    %v422 = vmul.f32 %v341, %v400
    %v423 = vmul.f32 %v343, %v400
    %v424 = vmul.f32 %v345, %v415
    %v425 = vmul.f32 %v347, %v415
    %v426 = vmul.f32 %v349, %v415
    %v427 = vmul.f32 %v351, %v415
    %v428 = vmul.f32 %v353, %v415
    %v429 = vmul.f32 %v355, %v415
    %v430 = vmul.f32 %v357, %v415
    %v431 = vmul.f32 %v359, %v415
    %432 = vst [vmem:[#allocation4] sm:$0xff] %v416
    %433 = vst [vmem:[#allocation4 + $0x8] sm:$0xff] %v417
    %434 = vst [vmem:[#allocation4 + $0x10] sm:$0xff] %v418
    %435 = vst [vmem:[#allocation4 + $0x18] sm:$0xff] %v419
    %436 = vst [vmem:[#allocation4 + $0x20] sm:$0xff] %v420
    %437 = vst [vmem:[#allocation4 + $0x28] sm:$0xff] %v421
    %438 = vst [vmem:[#allocation4 + $0x30] sm:$0xff] %v422
    %439 = vst [vmem:[#allocation4 + $0x38] sm:$0xff] %v423
    %440 = vst [vmem:[#allocation4 + $0x40] sm:$0x3] %v424
    %441 = vst [vmem:[#allocation4 + $0x48] sm:$0x3] %v425
    %442 = vst [vmem:[#allocation4 + $0x50] sm:$0x3] %v426
    %443 = vst [vmem:[#allocation4 + $0x58] sm:$0x3] %v427
    %444 = vst [vmem:[#allocation4 + $0x60] sm:$0x3] %v428
    %445 = vst [vmem:[#allocation4 + $0x68] sm:$0x3] %v429
    %446 = vst [vmem:[#allocation4 + $0x70] sm:$0x3] %v430
    %447 = vst [vmem:[#allocation4 + $0x78] sm:$0x3] %v431
    %v448 = vld [vmem:[%s1] sm:$0xff]
    %v449 = vld [vmem:[%s4] sm:$0xff]
    %vm450 = vcmask 80896
    %v452 = vsel %vm450, %v449, 0
    %v455 = vsel %vm294, %v424, 0
    %v458 = vsel %vm294, %v425, 0
    %v461 = vsel %vm294, %v426, 0
    %v464 = vsel %vm294, %v427, 0
    %v467 = vsel %vm294, %v428, 0
    %v470 = vsel %vm294, %v429, 0
    %v473 = vsel %vm294, %v430, 0
    %v476 = vsel %vm294, %v431, 0
    %478 = vmatpush.msra.mxu0 0.0
    %479 = vmatpush.msra.mxu0 0.0
    %480 = vmatpush.msra.mxu0 0.0
    %481 = vmatpush.msra.mxu0 0.0
    %482 = vmatpush.msra.mxu0 0.0
    %483 = vmatpush.msra.mxu0 0.0
    %484 = vmatpush.msra.mxu0 0.0
    %485 = vmatpush.msra.mxu0 0.0
    %486 = vmatpush.msra.mxu0 0.0
    %487 = vmatpush.msra.mxu0 0.0
    %488 = vmatpush.msra.mxu0 0.0
    %489 = vmatpush.msra.mxu0 0.0
    %490 = vmatpush.msra.mxu0 0.0
    %491 = vmatpush.msra.mxu0 0.0
    %492 = vmatpush.msra.mxu0 %v455
    %493 = vmatpush.msra.mxu0 %v416
    %494 = vmatmul.f32.gmra.mxu0 %v452
    %v495 = vpop.f32.mrf.mxu0
    %v496 = vadd.f32 0.0, %v495
    %497 = vdwg.mxu0
    %498 = vmatpush.msra.mxu0 0.0
    %499 = vmatpush.msra.mxu0 0.0
    %500 = vmatpush.msra.mxu0 0.0
    %501 = vmatpush.msra.mxu0 0.0
    %502 = vmatpush.msra.mxu0 0.0
    %503 = vmatpush.msra.mxu0 0.0
    %504 = vmatpush.msra.mxu0 0.0
    %505 = vmatpush.msra.mxu0 0.0
    %506 = vmatpush.msra.mxu0 0.0
    %507 = vmatpush.msra.mxu0 0.0
    %508 = vmatpush.msra.mxu0 0.0
    %509 = vmatpush.msra.mxu0 0.0
    %510 = vmatpush.msra.mxu0 0.0
    %511 = vmatpush.msra.mxu0 0.0
    %512 = vmatpush.msra.mxu0 %v458
    %513 = vmatpush.msra.mxu0 %v417
    %514 = vmatmul.f32.gmra.mxu0 %v452
    %v515 = vpop.f32.mrf.mxu0
    %v516 = vadd.f32 0.0, %v515
    %517 = vdwg.mxu0
    %518 = vmatpush.msra.mxu0 0.0
    %519 = vmatpush.msra.mxu0 0.0
    %520 = vmatpush.msra.mxu0 0.0
    %521 = vmatpush.msra.mxu0 0.0
    %522 = vmatpush.msra.mxu0 0.0
    %523 = vmatpush.msra.mxu0 0.0
    %524 = vmatpush.msra.mxu0 0.0
    %525 = vmatpush.msra.mxu0 0.0
    %526 = vmatpush.msra.mxu0 0.0
    %527 = vmatpush.msra.mxu0 0.0
    %528 = vmatpush.msra.mxu0 0.0
    %529 = vmatpush.msra.mxu0 0.0
    %530 = vmatpush.msra.mxu0 0.0
    %531 = vmatpush.msra.mxu0 0.0
    %532 = vmatpush.msra.mxu0 %v461
    %533 = vmatpush.msra.mxu0 %v418
    %534 = vmatmul.f32.gmra.mxu0 %v452
    %v535 = vpop.f32.mrf.mxu0
    %v536 = vadd.f32 0.0, %v535
    %537 = vdwg.mxu0
    %538 = vmatpush.msra.mxu0 0.0
    %539 = vmatpush.msra.mxu0 0.0
    %540 = vmatpush.msra.mxu0 0.0
    %541 = vmatpush.msra.mxu0 0.0
    %542 = vmatpush.msra.mxu0 0.0
    %543 = vmatpush.msra.mxu0 0.0
    %544 = vmatpush.msra.mxu0 0.0
    %545 = vmatpush.msra.mxu0 0.0
    %546 = vmatpush.msra.mxu0 0.0
    %547 = vmatpush.msra.mxu0 0.0
    %548 = vmatpush.msra.mxu0 0.0
    %549 = vmatpush.msra.mxu0 0.0
    %550 = vmatpush.msra.mxu0 0.0
    %551 = vmatpush.msra.mxu0 0.0
    %552 = vmatpush.msra.mxu0 %v464
    %553 = vmatpush.msra.mxu0 %v419
    %554 = vmatmul.f32.gmra.mxu0 %v452
    %v555 = vpop.f32.mrf.mxu0
    %v556 = vadd.f32 0.0, %v555
    %557 = vdwg.mxu0
    %558 = vmatpush.msra.mxu0 0.0
    %559 = vmatpush.msra.mxu0 0.0
    %560 = vmatpush.msra.mxu0 0.0
    %561 = vmatpush.msra.mxu0 0.0
    %562 = vmatpush.msra.mxu0 0.0
    %563 = vmatpush.msra.mxu0 0.0
    %564 = vmatpush.msra.mxu0 0.0
    %565 = vmatpush.msra.mxu0 0.0
    %566 = vmatpush.msra.mxu0 0.0
    %567 = vmatpush.msra.mxu0 0.0
    %568 = vmatpush.msra.mxu0 0.0
    %569 = vmatpush.msra.mxu0 0.0
    %570 = vmatpush.msra.mxu0 0.0
    %571 = vmatpush.msra.mxu0 0.0
    %572 = vmatpush.msra.mxu0 %v467
    %573 = vmatpush.msra.mxu0 %v420
    %574 = vmatmul.f32.gmra.mxu0 %v452
    %v575 = vpop.f32.mrf.mxu0
    %v576 = vadd.f32 0.0, %v575
    %577 = vdwg.mxu0
    %578 = vmatpush.msra.mxu0 0.0
    %579 = vmatpush.msra.mxu0 0.0
    %580 = vmatpush.msra.mxu0 0.0
    %581 = vmatpush.msra.mxu0 0.0
    %582 = vmatpush.msra.mxu0 0.0
    %583 = vmatpush.msra.mxu0 0.0
    %584 = vmatpush.msra.mxu0 0.0
    %585 = vmatpush.msra.mxu0 0.0
    %586 = vmatpush.msra.mxu0 0.0
    %587 = vmatpush.msra.mxu0 0.0
    %588 = vmatpush.msra.mxu0 0.0
    %589 = vmatpush.msra.mxu0 0.0
    %590 = vmatpush.msra.mxu0 0.0
    %591 = vmatpush.msra.mxu0 0.0
    %592 = vmatpush.msra.mxu0 %v470
    %593 = vmatpush.msra.mxu0 %v421
    %594 = vmatmul.f32.gmra.mxu0 %v452
    %v595 = vpop.f32.mrf.mxu0
    %v596 = vadd.f32 0.0, %v595
    %597 = vdwg.mxu0
    %598 = vmatpush.msra.mxu0 0.0
    %599 = vmatpush.msra.mxu0 0.0
    %600 = vmatpush.msra.mxu0 0.0
    %601 = vmatpush.msra.mxu0 0.0
    %602 = vmatpush.msra.mxu0 0.0
    %603 = vmatpush.msra.mxu0 0.0
    %604 = vmatpush.msra.mxu0 0.0
    %605 = vmatpush.msra.mxu0 0.0
    %606 = vmatpush.msra.mxu0 0.0
    %607 = vmatpush.msra.mxu0 0.0
    %608 = vmatpush.msra.mxu0 0.0
    %609 = vmatpush.msra.mxu0 0.0
    %610 = vmatpush.msra.mxu0 0.0
    %611 = vmatpush.msra.mxu0 0.0
    %612 = vmatpush.msra.mxu0 %v473
    %613 = vmatpush.msra.mxu0 %v422
    %614 = vmatmul.f32.gmra.mxu0 %v452
    %v615 = vpop.f32.mrf.mxu0
    %v616 = vadd.f32 0.0, %v615
    %617 = vdwg.mxu0
    %618 = vmatpush.msra.mxu0 0.0
    %619 = vmatpush.msra.mxu0 0.0
    %620 = vmatpush.msra.mxu0 0.0
    %621 = vmatpush.msra.mxu0 0.0
    %622 = vmatpush.msra.mxu0 0.0
    %623 = vmatpush.msra.mxu0 0.0
    %624 = vmatpush.msra.mxu0 0.0
    %625 = vmatpush.msra.mxu0 0.0
    %626 = vmatpush.msra.mxu0 0.0
    %627 = vmatpush.msra.mxu0 0.0
    %628 = vmatpush.msra.mxu0 0.0
    %629 = vmatpush.msra.mxu0 0.0
    %630 = vmatpush.msra.mxu0 0.0
    %631 = vmatpush.msra.mxu0 0.0
    %632 = vmatpush.msra.mxu0 %v476
    %633 = vmatpush.msra.mxu0 %v423
    %634 = vmatmul.f32.gmra.mxu0 %v452
    %v635 = vpop.f32.mrf.mxu0
    %v636 = vadd.f32 0.0, %v635
    %637 = vdwg.mxu0
    %638 = vst [vmem:[#allocation1] ss:$2 sm:$0xff] %v24
    %s639 = scalar_lea.vmem [#allocation1], 16
    %640 = vst [vmem:[%s639] ss:$2 sm:$0xff] %v25
    %s641 = scalar_lea.vmem [#allocation1], 32
    %642 = vst [vmem:[%s641] ss:$2 sm:$0xff] %v26
    %s643 = scalar_lea.vmem [#allocation1], 48
    %644 = vst [vmem:[%s643] ss:$2 sm:$0xff] %v27
    %v645 = vld.sshfl [vmem:[#allocation1] sm:$0xff pattern:$0x75316420]
    %v646 = vld.sshfl [vmem:[#allocation1 + $0x8] sm:$0xff pattern:$0x75316420]
    %v647 = vld.sshfl [vmem:[#allocation1 + $0x10] sm:$0xff pattern:$0x75316420]
    %v648 = vld.sshfl [vmem:[#allocation1 + $0x18] sm:$0xff pattern:$0x75316420]
    %v649 = vld.sshfl [vmem:[#allocation1 + $0x20] sm:$0xff pattern:$0x75316420]
    %v650 = vld.sshfl [vmem:[#allocation1 + $0x28] sm:$0xff pattern:$0x75316420]
    %v651 = vld.sshfl [vmem:[#allocation1 + $0x30] sm:$0xff pattern:$0x75316420]
    %v652 = vld.sshfl [vmem:[#allocation1 + $0x38] sm:$0xff pattern:$0x75316420]
    %v654 = vsel %vm61, %v448, 0
    %v656 = vsel %vm68, %v645, 0
    %v658 = vsel %vm68, %v646, 0
    %v660 = vsel %vm68, %v647, 0
    %v662 = vsel %vm68, %v648, 0
    %v664 = vsel %vm68, %v649, 0
    %v666 = vsel %vm68, %v650, 0
    %v668 = vsel %vm68, %v651, 0
    %v670 = vsel %vm68, %v652, 0
    %672 = vmatpush.msra.mxu0 0.0
    %673 = vmatpush.msra.mxu0 0.0
    %674 = vmatpush.msra.mxu0 0.0
    %675 = vmatpush.msra.mxu0 0.0
    %676 = vmatpush.msra.mxu0 0.0
    %677 = vmatpush.msra.mxu0 0.0
    %678 = vmatpush.msra.mxu0 0.0
    %679 = vmatpush.msra.mxu0 0.0
    %680 = vmatpush.msra.mxu0 0.0
    %681 = vmatpush.msra.mxu0 0.0
    %682 = vmatpush.msra.mxu0 0.0
    %683 = vmatpush.msra.mxu0 0.0
    %684 = vmatpush.msra.mxu0 0.0
    %685 = vmatpush.msra.mxu0 0.0
    %686 = vmatpush.msra.mxu0 0.0
    %687 = vmatpush.msra.mxu0 %v656
    %688 = vmatmul.f32.gmra.mxu0 %v654
    %v689 = vpop.f32.mrf.mxu0
    %v690 = vadd.f32 %v496, %v689
    %691 = vdwg.mxu0
    %692 = vmatpush.msra.mxu0 0.0
    %693 = vmatpush.msra.mxu0 0.0
    %694 = vmatpush.msra.mxu0 0.0
    %695 = vmatpush.msra.mxu0 0.0
    %696 = vmatpush.msra.mxu0 0.0
    %697 = vmatpush.msra.mxu0 0.0
    %698 = vmatpush.msra.mxu0 0.0
    %699 = vmatpush.msra.mxu0 0.0
    %700 = vmatpush.msra.mxu0 0.0
    %701 = vmatpush.msra.mxu0 0.0
    %702 = vmatpush.msra.mxu0 0.0
    %703 = vmatpush.msra.mxu0 0.0
    %704 = vmatpush.msra.mxu0 0.0
    %705 = vmatpush.msra.mxu0 0.0
    %706 = vmatpush.msra.mxu0 0.0
    %707 = vmatpush.msra.mxu0 %v658
    %708 = vmatmul.f32.gmra.mxu0 %v654
    %v709 = vpop.f32.mrf.mxu0
    %v710 = vadd.f32 %v516, %v709
    %711 = vdwg.mxu0
    %712 = vmatpush.msra.mxu0 0.0
    %713 = vmatpush.msra.mxu0 0.0
    %714 = vmatpush.msra.mxu0 0.0
    %715 = vmatpush.msra.mxu0 0.0
    %716 = vmatpush.msra.mxu0 0.0
    %717 = vmatpush.msra.mxu0 0.0
    %718 = vmatpush.msra.mxu0 0.0
    %719 = vmatpush.msra.mxu0 0.0
    %720 = vmatpush.msra.mxu0 0.0
    %721 = vmatpush.msra.mxu0 0.0
    %722 = vmatpush.msra.mxu0 0.0
    %723 = vmatpush.msra.mxu0 0.0
    %724 = vmatpush.msra.mxu0 0.0
    %725 = vmatpush.msra.mxu0 0.0
    %726 = vmatpush.msra.mxu0 0.0
    %727 = vmatpush.msra.mxu0 %v660
    %728 = vmatmul.f32.gmra.mxu0 %v654
    %v729 = vpop.f32.mrf.mxu0
    %v730 = vadd.f32 %v536, %v729
    %731 = vdwg.mxu0
    %732 = vmatpush.msra.mxu0 0.0
    %733 = vmatpush.msra.mxu0 0.0
    %734 = vmatpush.msra.mxu0 0.0
    %735 = vmatpush.msra.mxu0 0.0
    %736 = vmatpush.msra.mxu0 0.0
    %737 = vmatpush.msra.mxu0 0.0
    %738 = vmatpush.msra.mxu0 0.0
    %739 = vmatpush.msra.mxu0 0.0
    %740 = vmatpush.msra.mxu0 0.0
    %741 = vmatpush.msra.mxu0 0.0
    %742 = vmatpush.msra.mxu0 0.0
    %743 = vmatpush.msra.mxu0 0.0
    %744 = vmatpush.msra.mxu0 0.0
    %745 = vmatpush.msra.mxu0 0.0
    %746 = vmatpush.msra.mxu0 0.0
    %747 = vmatpush.msra.mxu0 %v662
    %748 = vmatmul.f32.gmra.mxu0 %v654
    %v749 = vpop.f32.mrf.mxu0
    %v750 = vadd.f32 %v556, %v749
    %751 = vdwg.mxu0
    %752 = vmatpush.msra.mxu0 0.0
    %753 = vmatpush.msra.mxu0 0.0
    %754 = vmatpush.msra.mxu0 0.0
    %755 = vmatpush.msra.mxu0 0.0
    %756 = vmatpush.msra.mxu0 0.0
    %757 = vmatpush.msra.mxu0 0.0
    %758 = vmatpush.msra.mxu0 0.0
    %759 = vmatpush.msra.mxu0 0.0
    %760 = vmatpush.msra.mxu0 0.0
    %761 = vmatpush.msra.mxu0 0.0
    %762 = vmatpush.msra.mxu0 0.0
    %763 = vmatpush.msra.mxu0 0.0
    %764 = vmatpush.msra.mxu0 0.0
    %765 = vmatpush.msra.mxu0 0.0
    %766 = vmatpush.msra.mxu0 0.0
    %767 = vmatpush.msra.mxu0 %v664
    %768 = vmatmul.f32.gmra.mxu0 %v654
    %v769 = vpop.f32.mrf.mxu0
    %v770 = vadd.f32 %v576, %v769
    %771 = vdwg.mxu0
    %772 = vmatpush.msra.mxu0 0.0
    %773 = vmatpush.msra.mxu0 0.0
    %774 = vmatpush.msra.mxu0 0.0
    %775 = vmatpush.msra.mxu0 0.0
    %776 = vmatpush.msra.mxu0 0.0
    %777 = vmatpush.msra.mxu0 0.0
    %778 = vmatpush.msra.mxu0 0.0
    %779 = vmatpush.msra.mxu0 0.0
    %780 = vmatpush.msra.mxu0 0.0
    %781 = vmatpush.msra.mxu0 0.0
    %782 = vmatpush.msra.mxu0 0.0
    %783 = vmatpush.msra.mxu0 0.0
    %784 = vmatpush.msra.mxu0 0.0
    %785 = vmatpush.msra.mxu0 0.0
    %786 = vmatpush.msra.mxu0 0.0
    %787 = vmatpush.msra.mxu0 %v666
    %788 = vmatmul.f32.gmra.mxu0 %v654
    %v789 = vpop.f32.mrf.mxu0
    %v790 = vadd.f32 %v596, %v789
    %791 = vdwg.mxu0
    %792 = vmatpush.msra.mxu0 0.0
    %793 = vmatpush.msra.mxu0 0.0
    %794 = vmatpush.msra.mxu0 0.0
    %795 = vmatpush.msra.mxu0 0.0
    %796 = vmatpush.msra.mxu0 0.0
    %797 = vmatpush.msra.mxu0 0.0
    %798 = vmatpush.msra.mxu0 0.0
    %799 = vmatpush.msra.mxu0 0.0
    %800 = vmatpush.msra.mxu0 0.0
    %801 = vmatpush.msra.mxu0 0.0
    %802 = vmatpush.msra.mxu0 0.0
    %803 = vmatpush.msra.mxu0 0.0
    %804 = vmatpush.msra.mxu0 0.0
    %805 = vmatpush.msra.mxu0 0.0
    %806 = vmatpush.msra.mxu0 0.0
    %807 = vmatpush.msra.mxu0 %v668
    %808 = vmatmul.f32.gmra.mxu0 %v654
    %v809 = vpop.f32.mrf.mxu0
    %v810 = vadd.f32 %v616, %v809
    %811 = vdwg.mxu0
    %812 = vmatpush.msra.mxu0 0.0
    %813 = vmatpush.msra.mxu0 0.0
    %814 = vmatpush.msra.mxu0 0.0
    %815 = vmatpush.msra.mxu0 0.0
    %816 = vmatpush.msra.mxu0 0.0
    %817 = vmatpush.msra.mxu0 0.0
    %818 = vmatpush.msra.mxu0 0.0
    %819 = vmatpush.msra.mxu0 0.0
    %820 = vmatpush.msra.mxu0 0.0
    %821 = vmatpush.msra.mxu0 0.0
    %822 = vmatpush.msra.mxu0 0.0
    %823 = vmatpush.msra.mxu0 0.0
    %824 = vmatpush.msra.mxu0 0.0
    %825 = vmatpush.msra.mxu0 0.0
    %826 = vmatpush.msra.mxu0 0.0
    %827 = vmatpush.msra.mxu0 %v670
    %828 = vmatmul.f32.gmra.mxu0 %v654
    %v829 = vpop.f32.mrf.mxu0
    %v830 = vadd.f32 %v636, %v829
    %831 = vdwg.mxu0
    %v832 = vmax.f32 %v690, 0.0
    %v833 = vmax.f32 %v710, 0.0
    %v834 = vmax.f32 %v730, 0.0
    %v835 = vmax.f32 %v750, 0.0
    %v836 = vmax.f32 %v770, 0.0
    %v837 = vmax.f32 %v790, 0.0
    %v838 = vmax.f32 %v810, 0.0
    %v839 = vmax.f32 %v830, 0.0
    %v840 = vmin.f32 %v832, 1.0
    %v841 = vmin.f32 %v833, 1.0
    %v842 = vmin.f32 %v834, 1.0
    %v843 = vmin.f32 %v835, 1.0
    %v844 = vmin.f32 %v836, 1.0
    %v845 = vmin.f32 %v837, 1.0
    %v846 = vmin.f32 %v838, 1.0
    %v847 = vmin.f32 %v839, 1.0
    %848 = vst [vmem:[#allocation2] sm:$0xff] %v840
    %849 = vst [vmem:[#allocation2 + $0x8] sm:$0xff] %v841
    %850 = vst [vmem:[#allocation2 + $0x10] sm:$0xff] %v842
    %851 = vst [vmem:[#allocation2 + $0x18] sm:$0xff] %v843
    %852 = vst [vmem:[#allocation2 + $0x20] sm:$0xff] %v844
    %853 = vst [vmem:[#allocation2 + $0x28] sm:$0xff] %v845
    %854 = vst [vmem:[#allocation2 + $0x30] sm:$0xff] %v846
    %855 = vst [vmem:[#allocation2 + $0x38] sm:$0xff] %v847
    // Predicated region
    $region22: #{tpu_custom_call.1} parent=1 // pred_check
      _
    $region23: #{tpu_custom_call.1} parent=1 // pred_check_branch
      %857 = sbr.rel (0) target = $region25
    $region24: #{tpu_custom_call.1} parent=1 // pred_region
      %859 = vsyncadd [#allocation3], 0
      %s861 = sshll.u32 [#allocation2], 4
      %s862 = int_to_ptr.vmem [resolvable:$true] %s861
      %s863 = sshll.u32 %s5, 4
      %s864 = int_to_ptr.hbm [resolvable:$true] %s863
      %866 = dma.vmem_to_hbm [thread:$0]  %s862, 1024, %s864, [#allocation3]
    $region25: #{tpu_custom_call.1} parent=1 // pred_fallthru
      _
    // Predicated region
    $region26: #{tpu_custom_call.1} parent=1 // pred_check
      _
    $region27: #{tpu_custom_call.1} parent=1 // pred_check_branch
      %868 = sbr.rel (0) target = $region29
    $region28: #{tpu_custom_call.1} parent=1 // pred_region
      %870 = vsyncadd [#allocation5], 0
      %s871 = sshll.u32 [#allocation4], 4
      %s872 = int_to_ptr.vmem [resolvable:$true] %s871
      %s873 = sshll.u32 %s6, 4
      %s874 = int_to_ptr.hbm [resolvable:$true] %s873
      %879 = dma.vmem_to_hbm [thread:$0]  %s872, 2048, %s874, [#allocation5], 1024, 1024, 64
    $region29: #{tpu_custom_call.1} parent=1 // pred_fallthru
      _
    // Predicated region
    $region30: #{tpu_custom_call.1} parent=1 // pred_check
      _
    $region31: #{tpu_custom_call.1} parent=1 // pred_check_branch
      %881 = sbr.rel (0) target = $region33
    $region32: #{tpu_custom_call.1} parent=1 // pred_region
      %883 = dma.done [#allocation3], 1024
    $region33: #{tpu_custom_call.1} parent=1 // pred_fallthru
      _
    // Predicated region
    $region34: #{tpu_custom_call.1} parent=1 // pred_check
      _
    $region35: #{tpu_custom_call.1} parent=1 // pred_check_branch
      %885 = sbr.rel (0) target = $region37
    $region36: #{tpu_custom_call.1} parent=1 // pred_region
      %887 = dma.done [#allocation5], 2048
    $region37: #{tpu_custom_call.1} parent=1 // pred_fallthru
      _
    %888 = vsyncpa [#allocation3], 1
    %889 = vsyncpa [#allocation5], 1

</llo_original>
